<compile_context>
chip_gen: v5e
topology: v5e:2x2
jax: 0.10.0
libtpu: 0.0.40
codegen_flags: <defaults>
</compile_context>

<pallas_src>
import jax
import jax.numpy as jnp
from jax.experimental import pallas as pl
from jax.experimental.pallas import tpu as pltpu


def _seg_pa_kernel(x_ref, seg_ref, w1_ref, b1_ref, w2_ref, b2_ref, o_ref):
    # Blocks: x/seg/o are (C, T); w1 (Cmid, C); b1 (Cmid, 1); w2 (Cmid, 1);
    # b2 is a (1, 1) SMEM scalar.  T = spatial tile (lane axis).
    seg = seg_ref[...]                                           # (C, T)

    # 1x1 conv #1 (C -> Cmid) + ReLU : single MXU matmul (Cmid, C) @ (C, T).
    h = jnp.dot(w1_ref[...], seg, preferred_element_type=jnp.float32)
    h = jnp.maximum(h + b1_ref[...], 0.0)                        # (Cmid, T)

    # 1x1 conv #2 (Cmid -> 1) + Sigmoid : VPU multiply + sublane reduce
    # (no MXU op with a lane-width-1 output).
    s = jnp.sum(h * w2_ref[...], axis=0, keepdims=True)          # (1, T)
    y = jax.nn.sigmoid(s + b2_ref[0, 0])                         # (1, T), f32

    # Pixel attention: cast the small (1, T) attention row to the input dtype
    # (instead of upcasting the whole (C, T) x tile) and broadcast over C.
    o_ref[...] = (x_ref[...] * y.astype(x_ref.dtype)).astype(o_ref.dtype)


def _device_info():
    """(per-core VMEM capacity bytes, TensorCores per chip) with safe fallbacks."""
    vmem_cap = 64 << 20                       # conservative default (v7x-sized)
    try:
        vmem_cap = int(pltpu.get_tpu_info().vmem_capacity_bytes)
    except Exception:
        pass
    kind = ""
    try:
        kind = jax.devices()[0].device_kind.lower()
    except Exception:
        pass
    # v7x is the only generation with 2 TCs/chip (and 64 MiB VMEM per TC);
    # v5e / v6e are single-TC with 128 MiB.  Conservative default: assume 2.
    num_tc = 2 if ("7" in kind or vmem_cap <= (64 << 20)) else 1
    return vmem_cap, num_tc


def _even_tile(hw, cap):
    """Largest lane tile <= cap; prefer an exact 128-multiple divisor of hw."""
    if hw <= cap:
        return hw                              # single full-extent block
    cap128 = max(128, (cap // 128) * 128)
    if hw % 128 == 0:
        t = cap128
        while t >= 128:
            if hw % t == 0:
                return t                       # even split: no ragged tail
            t -= 128
    return cap128                              # ragged tail unavoidable


def _plan_tile(n, c, hw, stream_itemsize, vmem_cap, num_tc):
    """Pick the spatial (lane) tile from device VMEM, dtypes and TC count."""
    # Double-buffered x / seg / out streamed blocks, bytes per spatial lane.
    per_lane = 2 * c * stream_itemsize
    budget = vmem_cap // 3                     # ~42 MiB on v5e/v6e, ~21 MiB on v7x
    max_tile = max(128, (budget // per_lane) // 128 * 128)
    if num_tc > 1:
        # Guarantee >= 2*num_tc parallel grid steps so both TensorCores stream.
        target = 2 * num_tc
        if n < target:
            need = -(-target // n)             # ceil(target / n)
            max_tile = min(max_tile, max(128, (hw // need) // 128 * 128))
    return _even_tile(hw, max_tile)


def seg_palayer_pallas(x, seg, w1, b1, w2, b2, *, tile_hw=None):
    """seg_PALayer forward in native NCHW.

    x, seg : (N, C, H, W)
    w1     : (Cmid, C, 1, 1) conv1 weight   b1 : (Cmid,) bias
    w2     : (1, Cmid, 1, 1) conv2 weight   b2 : (1,)    bias
    tile_hw: optional spatial-tile override (testing / tuning).
    """
    N, C, H, W = x.shape
    HW = H * W
    Cmid = w1.shape[0]

    # Free reshapes (no transposes, no extra HBM traffic).
    x3 = x.reshape(N, C, HW)
    seg3 = seg.reshape(N, C, HW)
    w1m = w1.reshape(Cmid, C).astype(jnp.float32)
    b1c = b1.reshape(Cmid, 1).astype(jnp.float32)
    w2c = w2.reshape(Cmid, 1).astype(jnp.float32)
    b2s = b2.reshape(1, 1).astype(jnp.float32)

    vmem_cap, num_tc = _device_info()
    stream_itemsize = x.dtype.itemsize + seg.dtype.itemsize + x.dtype.itemsize
    if tile_hw is None:
        tile_hw = _plan_tile(N, C, HW, stream_itemsize, vmem_cap, num_tc)
    tile_hw = int(min(tile_hw, HW))

    grid = (N, pl.cdiv(HW, tile_hw))

    # VMEM limit derived from the actual blocks (+ headroom), clamped to device.
    streamed = 2 * C * tile_hw * stream_itemsize        # double-buffered x/seg/out
    temps = (2 * Cmid + 4) * tile_hw * 4                 # f32 h / y temporaries
    params = (Cmid * C + 2 * Cmid + 1) * 4
    vmem_limit = streamed + temps + params + (8 << 20)
    vmem_limit = max(vmem_limit, 16 << 20)
    vmem_limit = min(vmem_limit, vmem_cap - (4 << 20))

    # Advisory cost hint: this op is HBM-streaming bound (~0.3 FLOP/byte).
    cost = pl.CostEstimate(
        flops=2 * N * HW * Cmid * (C + 1) + N * HW * C,
        transcendentals=N * HW,
        bytes_accessed=N * HW * C * stream_itemsize + params,
    )

    out3 = pl.pallas_call(
        _seg_pa_kernel,
        out_shape=jax.ShapeDtypeStruct((N, C, HW), x.dtype),
        grid_spec=pltpu.PrefetchScalarGridSpec(
            num_scalar_prefetch=0,
            grid=grid,
            in_specs=[
                pl.BlockSpec((None, C, tile_hw), lambda n, j: (n, 0, j)),   # x
                pl.BlockSpec((None, C, tile_hw), lambda n, j: (n, 0, j)),   # seg
                pl.BlockSpec((Cmid, C), lambda n, j: (0, 0)),               # w1
                pl.BlockSpec((Cmid, 1), lambda n, j: (0, 0)),               # b1
                pl.BlockSpec((Cmid, 1), lambda n, j: (0, 0)),               # w2
                pl.BlockSpec(memory_space=pltpu.MemorySpace.SMEM),          # b2
            ],
            out_specs=pl.BlockSpec((None, C, tile_hw), lambda n, j: (n, 0, j)),
        ),
        compiler_params=pltpu.CompilerParams(
            dimension_semantics=("parallel", "parallel"),
            vmem_limit_bytes=int(vmem_limit),
        ),
        cost_estimate=cost,
    )(x3, seg3, w1m, b1c, w2c, b2s)

    return out3.reshape(N, C, H, W)


def seg_palayer_ref(x, seg, w1, b1, w2, b2):
    """Pure-JAX reference mirroring the PyTorch module (NCHW)."""
    N, C, H, W = x.shape
    Cmid = w1.shape[0]
    s = seg.reshape(N, C, H * W)
    h = jnp.einsum("mc,nct->nmt", w1.reshape(Cmid, C), s) + b1.reshape(1, Cmid, 1)
    h = jnp.maximum(h, 0.0)
    yl = jnp.einsum("om,nmt->not", w2.reshape(1, Cmid), h) + b2.reshape(1, 1, 1)
    y = jax.nn.sigmoid(yl).reshape(N, 1, H, W)
    return x * y


if __name__ == "__main__":
    key = jax.random.PRNGKey(0)
    k1, k2, k3, k4, k5, k6 = jax.random.split(key, 6)

    # --- Test 1: standard shapes (HW multiple of 128, auto tiling). ---------
    N, C, H, W = 2, 16, 16, 16
    Cmid = C // 8

    x = jax.random.normal(k1, (N, C, H, W), dtype=jnp.float32)
    seg = jax.random.normal(k2, (N, C, H, W), dtype=jnp.float32)
    w1 = 0.1 * jax.random.normal(k3, (Cmid, C, 1, 1), dtype=jnp.float32)
    b1 = 0.1 * jax.random.normal(k4, (Cmid,), dtype=jnp.float32)
    w2 = 0.1 * jax.random.normal(k5, (1, Cmid, 1, 1), dtype=jnp.float32)
    b2 = 0.1 * jax.random.normal(k6, (1,), dtype=jnp.float32)

    out = jax.block_until_ready(seg_palayer_pallas(x, seg, w1, b1, w2, b2))
    ref = seg_palayer_ref(x, seg, w1, b1, w2, b2)
    assert out.shape == (N, C, H, W)
    assert jnp.allclose(out, ref, atol=1e-5, rtol=1e-5), "mismatch vs reference (test 1)"

    # --- Test 2: ragged spatial tail (HW=400 not a multiple of tile=256). ---
    N2, C2, H2, W2 = 1, 16, 20, 20
    x2 = jax.random.normal(k1, (N2, C2, H2, W2), dtype=jnp.float32)
    seg2 = jax.random.normal(k2, (N2, C2, H2, W2), dtype=jnp.float32)
    out2 = jax.block_until_ready(
        seg_palayer_pallas(x2, seg2, w1, b1, w2, b2, tile_hw=256))
    ref2 = seg_palayer_ref(x2, seg2, w1, b1, w2, b2)
    assert jnp.allclose(out2, ref2, atol=1e-5, rtol=1e-5), "mismatch vs reference (test 2)"

    print("KERNEL_OK")
</pallas_src>

<mosaic_0001>
module attributes {stable_mosaic.version = 11 : i64} {
  func.func @_seg_pa_kernel(%arg0: i32, %arg1: i32, %arg2: memref<1x16x128xf32, #tpu.memory_space<vmem>>, %arg3: memref<1x16x128xf32, #tpu.memory_space<vmem>>, %arg4: memref<2x16xf32, #tpu.memory_space<vmem>>, %arg5: memref<2x1xf32, #tpu.memory_space<vmem>>, %arg6: memref<2x1xf32, #tpu.memory_space<vmem>>, %arg7: memref<1x1xf32, #tpu.memory_space<smem>>, %arg8: memref<1x16x128xf32, #tpu.memory_space<vmem>>) attributes {dimension_semantics = [#tpu.dimension_semantics<parallel>, #tpu.dimension_semantics<parallel>], iteration_bounds = array<i64: 2, 2>, scalar_prefetch = 0 : i64, scratch_operands = 0 : i64, tpu.core_type = #tpu.core_type<tc>, window_params = [{transform_indices = @transform_0, window_bounds = array<i64: 1, 16, 128>}, {transform_indices = @transform_1, window_bounds = array<i64: 1, 16, 128>}, {pipeline_mode = #tpu.pipeline_mode<synchronous>, transform_indices = @transform_2, window_bounds = array<i64: 2, 16>}, {pipeline_mode = #tpu.pipeline_mode<synchronous>, transform_indices = @transform_3, window_bounds = array<i64: 2, 1>}, {pipeline_mode = #tpu.pipeline_mode<synchronous>, transform_indices = @transform_4, window_bounds = array<i64: 2, 1>}, {transform_indices = @transform_5, window_bounds = array<i64: 1, 1>}, {transform_indices = @transform_6, window_bounds = array<i64: 1, 16, 128>}]} {
    %c0 = arith.constant 0 : index
    %c0_0 = arith.constant 0 : index
    %c0_1 = arith.constant 0 : index
    %0 = vector.load %arg3[%c0, %c0_0, %c0_1] : memref<1x16x128xf32, #tpu.memory_space<vmem>>, vector<1x16x128xf32>
    %1 = vector.shape_cast %0 : vector<1x16x128xf32> to vector<16x128xf32>
    %c0_2 = arith.constant 0 : index
    %c0_3 = arith.constant 0 : index
    %2 = vector.load %arg4[%c0_2, %c0_3] : memref<2x16xf32, #tpu.memory_space<vmem>>, vector<2x16xf32>
    %cst = arith.constant dense<0.000000e+00> : vector<2x128xf32>
    %3 = tpu.matmul %2, %1, %cst {dimension_numbers = #tpu.dot_dimension_numbers<[1], [0], [0], [1], [0, 0, 1, 1], [], []>} : vector<2x16xf32>, vector<16x128xf32>, vector<2x128xf32> -> vector<2x128xf32>
    %c0_4 = arith.constant 0 : index
    %c0_5 = arith.constant 0 : index
    %4 = vector.load %arg5[%c0_4, %c0_5] : memref<2x1xf32, #tpu.memory_space<vmem>>, vector<2x1xf32>
    %5 = vector.broadcast %4 : vector<2x1xf32> to vector<2x128xf32>
    %6 = arith.addf %3, %5 : vector<2x128xf32>
    %cst_6 = arith.constant 0.000000e+00 : f32
    %7 = vector.broadcast %cst_6 : f32 to vector<2x128xf32>
    %8 = arith.maximumf %6, %7 : vector<2x128xf32>
    %c0_7 = arith.constant 0 : index
    %c0_8 = arith.constant 0 : index
    %9 = vector.load %arg6[%c0_7, %c0_8] : memref<2x1xf32, #tpu.memory_space<vmem>>, vector<2x1xf32>
    %10 = vector.broadcast %9 : vector<2x1xf32> to vector<2x128xf32>
    %11 = arith.mulf %8, %10 : vector<2x128xf32>
    %cst_9 = arith.constant dense<0.000000e+00> : vector<128xf32>
    %12 = vector.multi_reduction <add>, %11, %cst_9 [0] : vector<2x128xf32> to vector<128xf32>
    %13 = vector.shape_cast %12 : vector<128xf32> to vector<1x128xf32>
    %c0_10 = arith.constant 0 : index
    %c0_11 = arith.constant 0 : index
    %14 = memref.load %arg7[%c0_10, %c0_11] : memref<1x1xf32, #tpu.memory_space<smem>>
    %15 = vector.broadcast %14 : f32 to vector<1x128xf32>
    %16 = arith.addf %13, %15 : vector<1x128xf32>
    %17 = arith.negf %16 : vector<1x128xf32>
    %18 = math.exp %17 : vector<1x128xf32>
    %cst_12 = arith.constant 1.000000e+00 : f32
    %19 = vector.broadcast %cst_12 : f32 to vector<1x128xf32>
    %20 = arith.addf %19, %18 : vector<1x128xf32>
    %21 = arith.divf %19, %20 : vector<1x128xf32>
    %c0_13 = arith.constant 0 : index
    %c0_14 = arith.constant 0 : index
    %c0_15 = arith.constant 0 : index
    %22 = vector.load %arg2[%c0_13, %c0_14, %c0_15] : memref<1x16x128xf32, #tpu.memory_space<vmem>>, vector<1x16x128xf32>
    %23 = vector.shape_cast %22 : vector<1x16x128xf32> to vector<16x128xf32>
    %24 = vector.broadcast %21 : vector<1x128xf32> to vector<16x128xf32>
    %25 = arith.mulf %23, %24 : vector<16x128xf32>
    %c0_16 = arith.constant 0 : index
    %c0_17 = arith.constant 0 : index
    %c0_18 = arith.constant 0 : index
    %26 = vector.load %arg8[%c0_16, %c0_17, %c0_18] : memref<1x16x128xf32, #tpu.memory_space<vmem>>, vector<1x16x128xf32>
    %27 = vector.shape_cast %26 : vector<1x16x128xf32> to vector<16x128xf32>
    %28 = vector.shape_cast %25 : vector<16x128xf32> to vector<1x16x128xf32>
    tpu.vector_store %arg8[%c0_16, %c0_17, %c0_18], %28 {strides = array<i32>} : memref<1x16x128xf32, #tpu.memory_space<vmem>>, vector<1x16x128xf32>,
    return
  }
  func.func @transform_0(%arg0: i32, %arg1: i32) -> (i32, i32, i32) {
    %c0_i32 = arith.constant 0 : i32
    %c0_i32_0 = arith.constant 0 : i32
    return %arg0, %c0_i32, %arg1 : i32, i32, i32
  }
  func.func @transform_1(%arg0: i32, %arg1: i32) -> (i32, i32, i32) {
    %c0_i32 = arith.constant 0 : i32
    %c0_i32_0 = arith.constant 0 : i32
    return %arg0, %c0_i32, %arg1 : i32, i32, i32
  }
  func.func @transform_2(%arg0: i32, %arg1: i32) -> (i32, i32) {
    %c0_i32 = arith.constant 0 : i32
    %c0_i32_0 = arith.constant 0 : i32
    %c0_i32_1 = arith.constant 0 : i32
    return %c0_i32, %c0_i32_0 : i32, i32
  }
  func.func @transform_3(%arg0: i32, %arg1: i32) -> (i32, i32) {
    %c0_i32 = arith.constant 0 : i32
    %c0_i32_0 = arith.constant 0 : i32
    %c0_i32_1 = arith.constant 0 : i32
    return %c0_i32, %c0_i32_0 : i32, i32
  }
  func.func @transform_4(%arg0: i32, %arg1: i32) -> (i32, i32) {
    %c0_i32 = arith.constant 0 : i32
    %c0_i32_0 = arith.constant 0 : i32
    %c0_i32_1 = arith.constant 0 : i32
    return %c0_i32, %c0_i32_0 : i32, i32
  }
  func.func @transform_5(%arg0: i32, %arg1: i32) -> (i32, i32) {
    %c0_i32 = arith.constant 0 : i32
    %c0_i32_0 = arith.constant 0 : i32
    %c0_i32_1 = arith.constant 0 : i32
    return %c0_i32, %c0_i32_0 : i32, i32
  }
  func.func @transform_6(%arg0: i32, %arg1: i32) -> (i32, i32, i32) {
    %c0_i32 = arith.constant 0 : i32
    %c0_i32_0 = arith.constant 0 : i32
    return %arg0, %c0_i32, %arg1 : i32, i32, i32
  }
}

</mosaic_0001>

<llo_original>
// kernel: tpu_custom_call.1
$region0: #{tpu_custom_call.1}
  #allocation0 [shape = 'u32[]', space=smem, size = 0x4, offset = 0x4, fixed_abs, tag = 'smem constant byte address 0x4 - core index']
  #allocation1 [shape = 'u32[72,128]{1,0:T(1,128)}', space=vmem, size = 0x9000, scoped, tag = 'internal scratch']
  #allocation2 [shape = 'f32[1,1]{1,0:T(1,128)S(6)}', space=smem, size = 0x200, scoped, tag = 'scoped memory for tpu_custom_call.1']
  %s0 = inlined_call_operand.hbm [shape: f32[2,16,256], index: 0, kind: input, shape index: {}]
  %s1 = inlined_call_operand.hbm [shape: f32[2,16,256], index: 1, kind: input, shape index: {}]
  %s2 = inlined_call_operand.vmem [shape: f32[2,16], index: 2, kind: input, shape index: {}]
  %s3 = inlined_call_operand.vmem [shape: f32[2,1], index: 3, kind: input, shape index: {}]
  %s4 = inlined_call_operand.vmem [shape: f32[2,1], index: 4, kind: input, shape index: {}]
  %s5 = inlined_call_operand.<no memory space> [shape: f32[1,1], index: 5, kind: input, shape index: {}]
  %s6 = inlined_call_operand.hbm [shape: f32[2,16,256], index: 6, kind: output, shape index: {}]
  %s7 = sld [smem:[#allocation0]]
  $region65: #{tpu_custom_call.1} parent=0
    _
  %s9 = ssub.s32 1, %s7
  %s10 = scalar_select 0, %s9, %s7
  %11 = sst [smem:[#allocation2]] %s5
  $region1: #{tpu_custom_call.1} parent=0
    #allocation3 [shape = 'u8[16384]{0}', space=vmem, size = 0x4000, scoped, tag = 'input window, operand 0']
    #allocation4 [shape = 's32[2]{0}', space=sflag, size = 0x8, scoped, tag = 'scoped memory for tpu_custom_call.1']
    #allocation5 [shape = 's32[2]{0}', space=sflag, size = 0x8, scoped, tag = 'scoped memory for tpu_custom_call.1']
    #allocation6 [shape = 'u8[16384]{0}', space=vmem, size = 0x4000, scoped, tag = 'input window, operand 1']
    #allocation7 [shape = 's32[2]{0}', space=sflag, size = 0x8, scoped, tag = 'scoped memory for tpu_custom_call.1']
    #allocation8 [shape = 'u8[16384]{0}', space=vmem, size = 0x4000, scoped, tag = 'output window, operand 0']
    %12 = vsyncpa [#allocation4], 0
    %s13 = scalar_lea.sflag [#allocation4], 1
    %14 = vsyncpa %s13, 0
    %15 = vsyncpa [#allocation7], 0
    %s16 = scalar_lea.sflag [#allocation7], 1
    %17 = vsyncpa %s16, 0
    %18 = vsyncpa [#allocation5], 0
    %s19 = scalar_lea.sflag [#allocation5], 1
    %20 = vsyncpa %s19, 0
    loop: start=0, step=1, limit=6
    $region2: #{tpu_custom_call.1} parent=1 // loop_pre_header
      _
    $region3: #{tpu_custom_call.1} parent=1 // loop_header
      %s22 = sphi 0, %s26
      %p23 = scmp.ge.s32.totalorder %s22, 6
      %s29 = sphi 0, %s41
      %s30 = sphi 0, %s37
      %s31 = sphi 0, %s29
      %s32 = sphi 0, %s30
      %s33 = sphi 0, %s31
      %s34 = sphi 0, %s32
      %s46 = sphi 0, %s48
      %s49 = sphi 0, %s46
      %s50 = sphi 0, %s49
      %s66 = sphi 0, %s50
      %s74 = sphi 0, %s76
      %s77 = sphi 0, %s74
      %s78 = sphi 0, %s77
      %s94 = sphi 0, %s78
      %s98 = sphi 0, %s98
      %s100 = sphi 0, %s98
      %s101 = sphi 0, %s100
      %s115 = sphi 0, %s101
      %s119 = sphi 0, %s119
      %s121 = sphi 0, %s119
      %s122 = sphi 0, %s121
      %s136 = sphi 0, %s122
      %s140 = sphi 0, %s140
      %s142 = sphi 0, %s140
      %s143 = sphi 0, %s142
      %s157 = sphi 0, %s143
      %s161 = sphi 0, %s161
      %s163 = sphi 0, %s161
      %s164 = sphi 0, %s163
      %s178 = sphi 0, %s164
      %s186 = sphi 0, %s188
      %s189 = sphi 0, %s186
      %s190 = sphi 0, %s189
      %s206 = sphi 0, %s190
    $region4: #{tpu_custom_call.1} parent=1 // loop_header_branch
      %25 = sbr.rel (%p23) target = $region8
    $region5: #{tpu_custom_call.1} parent=1 // loop_body
      %s27 = ssub.s32 %s22, 1
      %s28 = ssub.s32 %s22, 2
      %s35 = sadd.s32 1, %s30
      %p36 = scmp.ge.s32.totalorder %s35, 2
      %s37 = scalar_select %p36, 0, %s35
      %s38 = sadd.s32 1, %s29
      %s39 = scalar_select %p36, %s38, %s29
      %p40 = scmp.ge.s32.totalorder %s39, 2
      %s41 = scalar_select %p40, 0, %s39
      %s42 = ssub.s32 %s29, %s41
      %s43 = ssub.s32 %s30, %s37
      %s44 = sor.u32 %s42, %s43
      %p45 = scmp.eq.s32.totalorder %s44, 0
      %s47 = sadd.s32 %s46, 1
      %s48 = scalar_select %p45, %s46, %s47
      %p51 = pneg %p45
      %p52 = scmp.eq.s32.totalorder %s22, 3
      %p53 = por %p51, %p52
      %p54 = scmp.ne.s32.totalorder %s46, %s49
      %p55 = scmp.eq.s32.totalorder %s22, 0
      %p56 = por %p54, %p55
      %p57 = scmp.ne.s32.totalorder %s46, %s49
      %p58 = scmp.eq.s32.totalorder %s27, 3
      %p59 = por %p57, %p58
      %p60 = scmp.ne.s32.totalorder %s49, %s50
      %p61 = scmp.eq.s32.totalorder %s27, 0
      %p62 = por %p60, %p61
      %p63 = scmp.ne.s32.totalorder %s49, %s50
      %p64 = scmp.eq.s32.totalorder %s28, 3
      %p65 = por %p63, %p64
      %p67 = scmp.ne.s32.totalorder %s50, %s66
      %p68 = scmp.eq.s32.totalorder %s28, 0
      %p69 = por %p67, %p68
      %s70 = ssub.s32 %s29, %s41
      %s71 = ssub.s32 %s30, %s37
      %s72 = sor.u32 %s70, %s71
      %p73 = scmp.eq.s32.totalorder %s72, 0
      %s75 = sadd.s32 %s74, 1
      %s76 = scalar_select %p73, %s74, %s75
      %p79 = pneg %p73
      %p80 = scmp.eq.s32.totalorder %s22, 3
      %p81 = por %p79, %p80
      %p82 = scmp.ne.s32.totalorder %s74, %s77
      %p83 = scmp.eq.s32.totalorder %s22, 0
      %p84 = por %p82, %p83
      %p85 = scmp.ne.s32.totalorder %s74, %s77
      %p86 = scmp.eq.s32.totalorder %s27, 3
      %p87 = por %p85, %p86
      %p88 = scmp.ne.s32.totalorder %s77, %s78
      %p89 = scmp.eq.s32.totalorder %s27, 0
      %p90 = por %p88, %p89
      %p91 = scmp.ne.s32.totalorder %s77, %s78
      %p92 = scmp.eq.s32.totalorder %s28, 3
      %p93 = por %p91, %p92
      %p95 = scmp.ne.s32.totalorder %s78, %s94
      %p96 = scmp.eq.s32.totalorder %s28, 0
      %p97 = por %p95, %p96
      %s99 = sadd.s32 %s98, 1
      %p102 = scmp.eq.s32.totalorder %s22, 3
      %p103 = scmp.ne.s32.totalorder %s98, %s100
      %p104 = scmp.eq.s32.totalorder %s22, 0
      %p105 = por %p103, %p104
      %p106 = scmp.ne.s32.totalorder %s98, %s100
      %p107 = scmp.eq.s32.totalorder %s27, 3
      %p108 = por %p106, %p107
      %p109 = scmp.ne.s32.totalorder %s100, %s101
      %p110 = scmp.eq.s32.totalorder %s27, 0
      %p111 = por %p109, %p110
      %p112 = scmp.ne.s32.totalorder %s100, %s101
      %p113 = scmp.eq.s32.totalorder %s28, 3
      %p114 = por %p112, %p113
      %p116 = scmp.ne.s32.totalorder %s101, %s115
      %p117 = scmp.eq.s32.totalorder %s28, 0
      %p118 = por %p116, %p117
      %s120 = sadd.s32 %s119, 1
      %p123 = scmp.eq.s32.totalorder %s22, 3
      %p124 = scmp.ne.s32.totalorder %s119, %s121
      %p125 = scmp.eq.s32.totalorder %s22, 0
      %p126 = por %p124, %p125
      %p127 = scmp.ne.s32.totalorder %s119, %s121
      %p128 = scmp.eq.s32.totalorder %s27, 3
      %p129 = por %p127, %p128
      %p130 = scmp.ne.s32.totalorder %s121, %s122
      %p131 = scmp.eq.s32.totalorder %s27, 0
      %p132 = por %p130, %p131
      %p133 = scmp.ne.s32.totalorder %s121, %s122
      %p134 = scmp.eq.s32.totalorder %s28, 3
      %p135 = por %p133, %p134
      %p137 = scmp.ne.s32.totalorder %s122, %s136
      %p138 = scmp.eq.s32.totalorder %s28, 0
      %p139 = por %p137, %p138
      %s141 = sadd.s32 %s140, 1
      %p144 = scmp.eq.s32.totalorder %s22, 3
      %p145 = scmp.ne.s32.totalorder %s140, %s142
      %p146 = scmp.eq.s32.totalorder %s22, 0
      %p147 = por %p145, %p146
      %p148 = scmp.ne.s32.totalorder %s140, %s142
      %p149 = scmp.eq.s32.totalorder %s27, 3
      %p150 = por %p148, %p149
      %p151 = scmp.ne.s32.totalorder %s142, %s143
      %p152 = scmp.eq.s32.totalorder %s27, 0
      %p153 = por %p151, %p152
      %p154 = scmp.ne.s32.totalorder %s142, %s143
      %p155 = scmp.eq.s32.totalorder %s28, 3
      %p156 = por %p154, %p155
      %p158 = scmp.ne.s32.totalorder %s143, %s157
      %p159 = scmp.eq.s32.totalorder %s28, 0
      %p160 = por %p158, %p159
      %s162 = sadd.s32 %s161, 1
      %p165 = scmp.eq.s32.totalorder %s22, 3
      %p166 = scmp.ne.s32.totalorder %s161, %s163
      %p167 = scmp.eq.s32.totalorder %s22, 0
      %p168 = por %p166, %p167
      %p169 = scmp.ne.s32.totalorder %s161, %s163
      %p170 = scmp.eq.s32.totalorder %s27, 3
      %p171 = por %p169, %p170
      %p172 = scmp.ne.s32.totalorder %s163, %s164
      %p173 = scmp.eq.s32.totalorder %s27, 0
      %p174 = por %p172, %p173
      %p175 = scmp.ne.s32.totalorder %s163, %s164
      %p176 = scmp.eq.s32.totalorder %s28, 3
      %p177 = por %p175, %p176
      %p179 = scmp.ne.s32.totalorder %s164, %s178
      %p180 = scmp.eq.s32.totalorder %s28, 0
      %p181 = por %p179, %p180
      %s182 = ssub.s32 %s29, %s41
      %s183 = ssub.s32 %s30, %s37
      %s184 = sor.u32 %s182, %s183
      %p185 = scmp.eq.s32.totalorder %s184, 0
      %s187 = sadd.s32 %s186, 1
      %s188 = scalar_select %p185, %s186, %s187
      %p191 = pneg %p185
      %p192 = scmp.eq.s32.totalorder %s22, 3
      %p193 = por %p191, %p192
      %p194 = scmp.ne.s32.totalorder %s186, %s189
      %p195 = scmp.eq.s32.totalorder %s22, 0
      %p196 = por %p194, %p195
      %p197 = scmp.ne.s32.totalorder %s186, %s189
      %p198 = scmp.eq.s32.totalorder %s27, 3
      %p199 = por %p197, %p198
      %p200 = scmp.ne.s32.totalorder %s189, %s190
      %p201 = scmp.eq.s32.totalorder %s27, 0
      %p202 = por %p200, %p201
      %p203 = scmp.ne.s32.totalorder %s189, %s190
      %p204 = scmp.eq.s32.totalorder %s28, 3
      %p205 = por %p203, %p204
      %p207 = scmp.ne.s32.totalorder %s190, %s206
      %p208 = scmp.eq.s32.totalorder %s28, 0
      %p209 = por %p207, %p208
      %p210 = scmp.le.s32.totalorder 1, %s22
      %p211 = scmp.lt.s32.totalorder %s22, 5
      %p212 = pnand %p210, %p211
      %p213 = pneg %p212
      // Predicated region
      $region9: #{tpu_custom_call.1} parent=5 // pred_check
        _
      $region10: #{tpu_custom_call.1} parent=5 // pred_check_branch
        %215 = sbr.rel (%p212) target = $region12
      $region11: #{tpu_custom_call.1} parent=5 // pred_region
        %s216 = ssub.s32 %s22, 1
        // Predicated region
        $region13: #{tpu_custom_call.1} parent=11 // pred_check
          %p217 = pneg %p111
        $region14: #{tpu_custom_call.1} parent=11 // pred_check_branch
          %219 = sbr.rel (%p217) target = $region16
        $region15: #{tpu_custom_call.1} parent=11 // pred_region
          _
        $region16: #{tpu_custom_call.1} parent=11 // pred_fallthru
          _
        // Predicated region
        $region17: #{tpu_custom_call.1} parent=11 // pred_check
          %p220 = pneg %p132
        $region18: #{tpu_custom_call.1} parent=11 // pred_check_branch
          %222 = sbr.rel (%p220) target = $region20
        $region19: #{tpu_custom_call.1} parent=11 // pred_region
          _
        $region20: #{tpu_custom_call.1} parent=11 // pred_fallthru
          _
        // Predicated region
        $region21: #{tpu_custom_call.1} parent=11 // pred_check
          %p223 = pneg %p153
        $region22: #{tpu_custom_call.1} parent=11 // pred_check_branch
          %225 = sbr.rel (%p223) target = $region24
        $region23: #{tpu_custom_call.1} parent=11 // pred_region
          _
        $region24: #{tpu_custom_call.1} parent=11 // pred_fallthru
          _
        // Predicated region
        $region25: #{tpu_custom_call.1} parent=11 // pred_check
          %p226 = pneg %p174
        $region26: #{tpu_custom_call.1} parent=11 // pred_check_branch
          %228 = sbr.rel (%p226) target = $region28
        $region27: #{tpu_custom_call.1} parent=11 // pred_region
          _
        $region28: #{tpu_custom_call.1} parent=11 // pred_fallthru
          _
      $region12: #{tpu_custom_call.1} parent=5 // pred_fallthru
        _
      %p229 = scmp.lt.s32.totalorder %s22, 4
      // Predicated region
      $region29: #{tpu_custom_call.1} parent=5 // pred_check
        %p230 = pneg %p229
      $region30: #{tpu_custom_call.1} parent=5 // pred_check_branch
        %232 = sbr.rel (%p230) target = $region32
      $region31: #{tpu_custom_call.1} parent=5 // pred_region
        // Predicated region
        $region33: #{tpu_custom_call.1} parent=31 // pred_check
          %p233 = pneg %p56
        $region34: #{tpu_custom_call.1} parent=31 // pred_check_branch
          %235 = sbr.rel (%p233) target = $region36
        $region35: #{tpu_custom_call.1} parent=31 // pred_region
          %s236 = sand.u32 %s46, 1
          %s237 = scalar_lea.sflag [#allocation4], %s236
          %s238 = sand.u32 %s46, 1
          %s239 = smul.addr %s238, 16
          %s240 = scalar_lea.vmem [#allocation3], %s239
          %242 = vsyncadd %s237, 0
          %s243 = smul.addr %s29, 4
          %s244 = sadd.s32 %s30, %s243
          %s245 = smul.addr %s244, 8
          %s246 = scalar_lea.hbm %s0, %s245
          %s247 = sshll.u32 %s246, 4
          %s248 = int_to_ptr.hbm [resolvable:$true] %s247
          %s249 = sshll.u32 %s240, 4
          %s250 = int_to_ptr.vmem [resolvable:$true] %s249
          %255 = dma.hbm_to_vmem [thread:$0]  %s248, 256, %s250, %s237, 256, 128, 8
        $region36: #{tpu_custom_call.1} parent=31 // pred_fallthru
          _
        // Predicated region
        $region37: #{tpu_custom_call.1} parent=31 // pred_check
          %p256 = pneg %p84
        $region38: #{tpu_custom_call.1} parent=31 // pred_check_branch
          %258 = sbr.rel (%p256) target = $region40
        $region39: #{tpu_custom_call.1} parent=31 // pred_region
          %s259 = sand.u32 %s74, 1
          %s260 = scalar_lea.sflag [#allocation7], %s259
          %s261 = sand.u32 %s74, 1
          %s262 = smul.addr %s261, 16
          %s263 = scalar_lea.vmem [#allocation6], %s262
          %265 = vsyncadd %s260, 0
          %s266 = smul.addr %s29, 4
          %s267 = sadd.s32 %s30, %s266
          %s268 = smul.addr %s267, 8
          %s269 = scalar_lea.hbm %s1, %s268
          %s270 = sshll.u32 %s269, 4
          %s271 = int_to_ptr.hbm [resolvable:$true] %s270
          %s272 = sshll.u32 %s263, 4
          %s273 = int_to_ptr.vmem [resolvable:$true] %s272
          %278 = dma.hbm_to_vmem [thread:$0]  %s271, 256, %s273, %s260, 256, 128, 8
        $region40: #{tpu_custom_call.1} parent=31 // pred_fallthru
          _
      $region32: #{tpu_custom_call.1} parent=5 // pred_fallthru
        _
      %p279 = scmp.le.s32.totalorder 1, %s22
      %p280 = scmp.lt.s32.totalorder %s22, 5
      %p281 = pnand %p279, %p280
      %p282 = pneg %p281
      // Predicated region
      $region41: #{tpu_custom_call.1} parent=5 // pred_check
        _
      $region42: #{tpu_custom_call.1} parent=5 // pred_check_branch
        %284 = sbr.rel (%p281) target = $region44
      $region43: #{tpu_custom_call.1} parent=5 // pred_region
        %s285 = ssub.s32 %s22, 1
        %s286 = sand.u32 %s49, 1
        %s287 = scalar_lea.sflag [#allocation4], %s286
        %s288 = sand.u32 %s49, 1
        %s289 = smul.addr %s288, 16
        %s290 = scalar_lea.vmem [#allocation3], %s289
        // Predicated region
        $region45: #{tpu_custom_call.1} parent=43 // pred_check
          %p291 = pneg %p62
        $region46: #{tpu_custom_call.1} parent=43 // pred_check_branch
          %293 = sbr.rel (%p291) target = $region48
        $region47: #{tpu_custom_call.1} parent=43 // pred_region
          %295 = dma.done %s287, 256
        $region48: #{tpu_custom_call.1} parent=43 // pred_fallthru
          _
        %s296 = sand.u32 %s77, 1
        %s297 = scalar_lea.sflag [#allocation7], %s296
        %s298 = sand.u32 %s77, 1
        %s299 = smul.addr %s298, 16
        %s300 = scalar_lea.vmem [#allocation6], %s299
        // Predicated region
        $region49: #{tpu_custom_call.1} parent=43 // pred_check
          %p301 = pneg %p90
        $region50: #{tpu_custom_call.1} parent=43 // pred_check_branch
          %303 = sbr.rel (%p301) target = $region52
        $region51: #{tpu_custom_call.1} parent=43 // pred_region
          %305 = dma.done %s297, 256
        $region52: #{tpu_custom_call.1} parent=43 // pred_fallthru
          _
        %s306 = sand.u32 %s49, 1
        %s307 = scalar_lea.sflag [#allocation4], %s306
        %s308 = sand.u32 %s49, 1
        %s309 = smul.addr %s308, 16
        %s310 = scalar_lea.vmem [#allocation3], %s309
        %p311 = pneg %p62
        %p312 = pneg %p59
        %s313 = sand.u32 %s77, 1
        %s314 = scalar_lea.sflag [#allocation7], %s313
        %s315 = sand.u32 %s77, 1
        %s316 = smul.addr %s315, 16
        %s317 = scalar_lea.vmem [#allocation6], %s316
        %p318 = pneg %p90
        %p319 = pneg %p87
        %p320 = pneg %p111
        %p321 = pneg %p108
        %p322 = pneg %p132
        %p323 = pneg %p129
        %p324 = pneg %p153
        %p325 = pneg %p150
        %p326 = pneg %p174
        %p327 = pneg %p171
        %p328 = pneg %p202
        %p329 = pneg %p199
        %s330 = sand.u32 %s189, 1
        %s331 = scalar_lea.sflag [#allocation5], %s330
        %s332 = sand.u32 %s189, 1
        %s333 = smul.addr %s332, 16
        %s334 = scalar_lea.vmem [#allocation8], %s333
        %v335 = vld [vmem:[%s300] sm:$0xff]
        %v336 = vld [vmem:[%s300 + $0x8] sm:$0xff]
        %v337 = vld [vmem:[%s2] sm:$0x3]
        %v338 = vld [vmem:[%s3] sm:$0x3]
        %340 = vset.pattern.permute.xlu0 0
        %341 = vperm.xlu0 %340, %v338
        %v342 = vpop.permute.xlu0 %341
        %vm344 = vcmask 130048
        %v346 = vsel %vm344, %v337, 0
        %348 = vmatpush.msra.mxu0 0.0
        %349 = vmatpush.msra.mxu0 0.0
        %350 = vmatpush.msra.mxu0 0.0
        %351 = vmatpush.msra.mxu0 0.0
        %352 = vmatpush.msra.mxu0 0.0
        %353 = vmatpush.msra.mxu0 0.0
        %354 = vmatpush.msra.mxu0 0.0
        %355 = vmatpush.msra.mxu0 0.0
        %356 = vmatpush.msra.mxu0 0.0
        %357 = vmatpush.msra.mxu0 0.0
        %358 = vmatpush.msra.mxu0 0.0
        %359 = vmatpush.msra.mxu0 0.0
        %360 = vmatpush.msra.mxu0 0.0
        %361 = vmatpush.msra.mxu0 0.0
        %362 = vmatpush.msra.mxu0 %v336
        %363 = vmatpush.msra.mxu0 %v335
        %364 = vmatmul.f32.gmra.mxu0 %v346
        %v365 = vpop.f32.mrf.mxu0
        %v366 = vadd.f32 %v342, %v365
        %367 = vdwg.mxu0
        %v368 = vmax.f32 %v366, 0.0
        %v369 = vld [vmem:[%s4] sm:$0x3]
        %371 = vset.pattern.permute.xlu0 0
        %372 = vperm.xlu0 %371, %v369
        %v373 = vpop.permute.xlu0 %372
        %v375 = vmul.f32 %v368, %v373
        %vm376 = vcmask 1041408
        %v377 = vsel %vm376, %v375, 0.0
        %v378 = vrot.slane %v377, 4
        %v379 = vadd.f32 %v377, %v378
        %v380 = vrot.slane %v379, 2
        %v381 = vadd.f32 %v379, %v380
        %v382 = vrot.slane %v381, 1
        %v383 = vadd.f32 %v381, %v382
        %s384 = sld [smem:[#allocation2]]
        %v385 = vstv %s384
        %v386 = vadd.f32 %v383, %v385
        %v387 = vxor.u32 %v386, 2147483648
        %v388 = vmul.f32 %v387, 1.442695
        %v389 = vpow.pop %v388
        %v390 = vadd.f32 %v389, 1.0
        %v391 = vrcp.pop %v390
        %v392 = vmul.f32 %v390, %v391
        %v393 = vsub.f32 1.0, %v392
        %v394 = vmul.f32 %v391, %v393
        %v395 = vadd.f32 %v391, %v394
        %vm396 = vweird.f32 %v390
        %vm397 = vweird.f32 %v391
        %vm398 = vmor %vm396, %vm397
        %v399 = vsel %vm398, %v391, %v395
        %v400 = vand.u32 2147483647, %v390
        %vm401 = vcmp.eq.f32.partialorder %v400, 8.507059e+37
        %v402 = vand.u32 %v390, 2147483648
        %v403 = vor.u32 1.1754944e-38, %v402
        %v404 = vsel %vm401, %v403, %v399
        %v405 = vmul.f32 1.0, %v404
        %v406 = vld [vmem:[%s290] sm:$0xff]
        %v407 = vld [vmem:[%s290 + $0x8] sm:$0xff]
        %v408 = vmul.f32 %v406, %v405
        %v409 = vmul.f32 %v407, %v405
        %410 = vst [vmem:[%s334] sm:$0xff] %v408
        %411 = vst [vmem:[%s334 + $0x8] sm:$0xff] %v409
        %s412 = sand.u32 %s189, 1
        %s413 = scalar_lea.sflag [#allocation5], %s412
        %s414 = sand.u32 %s189, 1
        %s415 = smul.addr %s414, 16
        %s416 = scalar_lea.vmem [#allocation8], %s415
        // Predicated region
        $region53: #{tpu_custom_call.1} parent=43 // pred_check
          %p417 = pneg %p199
        $region54: #{tpu_custom_call.1} parent=43 // pred_check_branch
          %419 = sbr.rel (%p417) target = $region56
        $region55: #{tpu_custom_call.1} parent=43 // pred_region
          %421 = vsyncadd %s413, 0
          %s422 = smul.addr %s31, 4
          %s423 = sadd.s32 %s32, %s422
          %s424 = smul.addr %s423, 8
          %s425 = scalar_lea.hbm %s6, %s424
          %s426 = sshll.u32 %s416, 4
          %s427 = int_to_ptr.vmem [resolvable:$true] %s426
          %s428 = sshll.u32 %s425, 4
          %s429 = int_to_ptr.hbm [resolvable:$true] %s428
          %434 = dma.vmem_to_hbm [thread:$0]  %s427, 256, %s429, %s413, 128, 256, 8
        $region56: #{tpu_custom_call.1} parent=43 // pred_fallthru
          _
      $region44: #{tpu_custom_call.1} parent=5 // pred_fallthru
        _
      %p435 = scmp.le.s32.totalorder 2, %s22
      // Predicated region
      $region57: #{tpu_custom_call.1} parent=5 // pred_check
        %p436 = pneg %p435
      $region58: #{tpu_custom_call.1} parent=5 // pred_check_branch
        %438 = sbr.rel (%p436) target = $region60
      $region59: #{tpu_custom_call.1} parent=5 // pred_region
        %s439 = ssub.s32 %s22, 2
        // Predicated region
        $region61: #{tpu_custom_call.1} parent=59 // pred_check
          %p440 = pneg %p205
        $region62: #{tpu_custom_call.1} parent=59 // pred_check_branch
          %442 = sbr.rel (%p440) target = $region64
        $region63: #{tpu_custom_call.1} parent=59 // pred_region
          %s443 = sand.u32 %s190, 1
          %s444 = scalar_lea.sflag [#allocation5], %s443
          %s445 = sand.u32 %s190, 1
          %s446 = smul.addr %s445, 16
          %s447 = scalar_lea.vmem [#allocation8], %s446
          %449 = dma.done %s444, 256
        $region64: #{tpu_custom_call.1} parent=59 // pred_fallthru
          _
      $region60: #{tpu_custom_call.1} parent=5 // pred_fallthru
        _
    $region6: #{tpu_custom_call.1} parent=1 // loop_footer
      %s26 = sadd.s32 1, %s22
    $region7: #{tpu_custom_call.1} parent=1 // loop_footer_branch
      %21 = sbr.rel target = $region3
    $region8: #{tpu_custom_call.1} parent=1 // loop_exit
      _
    %450 = vsyncpa [#allocation4], 1
    %s451 = scalar_lea.sflag [#allocation4], 1
    %452 = vsyncpa %s451, 1
    %453 = vsyncpa [#allocation7], 1
    %s454 = scalar_lea.sflag [#allocation7], 1
    %455 = vsyncpa %s454, 1
    %456 = vsyncpa [#allocation5], 1
    %s457 = scalar_lea.sflag [#allocation5], 1
    %458 = vsyncpa %s457, 1

</llo_original>
